<compile_context>
chip_gen: v7x
topology: tpu7x:2x2x1
jax: 0.10.0
libtpu: 0.0.40
codegen_flags: <defaults>
</compile_context>

<pallas_src>
import jax
import jax.numpy as jnp
from jax.experimental import pallas as pl
from jax.experimental.pallas import tpu as pltpu


def _flatten_copy_kernel(x_ref, o_ref):
    # Pure data movement: one lane-dense, sublane-dense tile per grid step.
    o_ref[...] = x_ref[...]


def _choose_layout(total_elems: int, itemsize: int, target_block_bytes: int = 2 << 20):
    """Pick (rows, lanes, block_rows) for a DMA-friendly copy of `total_elems`.

    lanes: multiple of 128 dividing total (prefer one that makes rows % 8 == 0).
    block_rows: multiple of 8 dividing rows, sized so a block is ~target_block_bytes.
    Returns None if total is not a multiple of 128 (caller falls back to free reshape).
    """
    lanes = None
    fallback_lanes = None
    for cand in (4096, 2048, 1024, 512, 256, 128):
        if total_elems % cand == 0:
            if fallback_lanes is None:
                fallback_lanes = cand
            if (total_elems // cand) % 8 == 0:
                lanes = cand
                break
    if lanes is None:
        lanes = fallback_lanes
    if lanes is None:
        return None

    rows = total_elems // lanes
    row_bytes = lanes * itemsize

    if rows * row_bytes <= target_block_bytes:
        block_rows = rows  # whole thing fits in one comfortable block
    else:
        budget_rows = max(1, target_block_bytes // row_bytes)
        block_rows = None
        d = 8
        while d <= min(rows, budget_rows):
            if rows % d == 0:
                block_rows = d
            d += 8
        if block_rows is None:
            # rows has no small multiple-of-8 divisor (practically unreachable since
            # we prefer lanes that make rows % 8 == 0, and small rows fit the budget).
            block_rows = rows
    return rows, lanes, block_rows


def flatten_forward(x: jax.Array, *, copy: bool = True) -> jax.Array:
    """Pallas equivalent of torch Flatten: (N, C, H, W) -> (N, C*H*W).

    copy=False returns the metadata-only reshape (optimal; zero HBM traffic).
    copy=True materializes the result via a lane/sublane-dense Pallas copy kernel.
    """
    n = x.shape[0]
    feat = 1
    for d in x.shape[1:]:
        feat *= d

    # The view itself (metadata-only, row-major like torch .view on contiguous NCHW).
    x2d = x.reshape(n, feat)
    if not copy:
        return x2d

    total = n * feat
    itemsize = jnp.dtype(x.dtype).itemsize
    layout = _choose_layout(total, itemsize)
    if layout is None:
        # Not a multiple of 128 elements: the free reshape is already the optimal
        # (and exact) result; a masked-store copy kernel would only add cost.
        return x2d

    rows, lanes, block_rows = layout
    flat = x2d.reshape(rows, lanes)  # contiguous re-view of the same row-major bytes
    block_bytes = block_rows * lanes * itemsize

    out = pl.pallas_call(
        _flatten_copy_kernel,
        out_shape=jax.ShapeDtypeStruct((rows, lanes), x.dtype),
        grid_spec=pltpu.PrefetchScalarGridSpec(
            num_scalar_prefetch=0,
            grid=(rows // block_rows,),
            in_specs=[pl.BlockSpec((block_rows, lanes), lambda i: (i, 0))],
            out_specs=pl.BlockSpec((block_rows, lanes), lambda i: (i, 0)),
        ),
        compiler_params=pltpu.CompilerParams(
            dimension_semantics=("parallel",),
            # Explicit budget: 2x double-buffered (in + out) blocks plus headroom.
            vmem_limit_bytes=max(16 * 1024 * 1024, 6 * block_bytes),
        ),
    )(flat)
    return out.reshape(n, feat)


if __name__ == "__main__":
    key = jax.random.PRNGKey(0)
    k1, k2 = jax.random.split(key)

    # Small NCHW input consistent with a CNN feature-extractor activation map.
    x = jax.random.normal(k1, (2, 4, 16, 16), dtype=jnp.float32)
    y = jax.block_until_ready(flatten_forward(x))
    ref = x.reshape(x.shape[0], -1)
    assert y.shape == (2, 4 * 16 * 16), y.shape
    assert y.dtype == x.dtype
    assert bool(jnp.array_equal(y, ref))

    # Larger activation: exercises multi-step grid with ~2 MiB lane-dense blocks.
    x_big = jax.random.normal(k2, (4, 64, 64, 64), dtype=jnp.float32)
    y_big = jax.block_until_ready(flatten_forward(x_big))
    assert y_big.shape == (4, 64 * 64 * 64)
    assert bool(jnp.array_equal(y_big, x_big.reshape(x_big.shape[0], -1)))

    # Zero-copy path (recommended in production): pure metadata reshape.
    y_view = jax.block_until_ready(flatten_forward(x, copy=False))
    assert bool(jnp.array_equal(y_view, ref))

    print("KERNEL_OK")
</pallas_src>

<mosaic_0001>
module attributes {stable_mosaic.version = 11 : i64} {
  func.func @_flatten_copy_kernel(%arg0: i32, %arg1: memref<8x256xf32, #tpu.memory_space<vmem>>, %arg2: memref<8x256xf32, #tpu.memory_space<vmem>>) attributes {dimension_semantics = [#tpu.dimension_semantics<parallel>], iteration_bounds = array<i64: 1>, scalar_prefetch = 0 : i64, scratch_operands = 0 : i64, tpu.core_type = #tpu.core_type<tc>, window_params = [{transform_indices = @transform_0, window_bounds = array<i64: 8, 256>}, {transform_indices = @transform_1, window_bounds = array<i64: 8, 256>}]} {
    %c0 = arith.constant 0 : index
    %c0_0 = arith.constant 0 : index
    %0 = vector.load %arg1[%c0, %c0_0] : memref<8x256xf32, #tpu.memory_space<vmem>>, vector<8x256xf32>
    %c0_1 = arith.constant 0 : index
    %c0_2 = arith.constant 0 : index
    %1 = vector.load %arg2[%c0_1, %c0_2] : memref<8x256xf32, #tpu.memory_space<vmem>>, vector<8x256xf32>
    tpu.vector_store %arg2[%c0_1, %c0_2], %0 {strides = array<i32>} : memref<8x256xf32, #tpu.memory_space<vmem>>, vector<8x256xf32>,
    return
  }
  func.func @transform_0(%arg0: i32) -> (i32, i32) {
    %c0_i32 = arith.constant 0 : i32
    %c0_i32_0 = arith.constant 0 : i32
    return %arg0, %c0_i32 : i32, i32
  }
  func.func @transform_1(%arg0: i32) -> (i32, i32) {
    %c0_i32 = arith.constant 0 : i32
    %c0_i32_0 = arith.constant 0 : i32
    return %arg0, %c0_i32 : i32, i32
  }
}

</mosaic_0001>

<llo_original>
// kernel: tpu_custom_call.1
$region0: #{tpu_custom_call.1}
  #allocation0 [shape = 'u32[]', space=smem, size = 0x4, offset = 0x4, fixed_abs, tag = 'smem constant byte address 0x4 - core index']
  #allocation1 [shape = 'u32[144,128]{1,0:T(1,128)}', space=vmem, size = 0x12000, scoped, tag = 'internal scratch']
  %s0 = inlined_call_operand.hbm [shape: f32[8,256], index: 0, kind: input, shape index: {}]
  %s1 = inlined_call_operand.hbm [shape: f32[8,256], index: 1, kind: output, shape index: {}]
  %s2 = sld [smem:[#allocation0]]
  $region18: #{tpu_custom_call.1} parent=0
    _
  %s4 = ssub.s32 1, %s2
  %s5 = scalar_select 0, %s4, %s2
  $region1: #{tpu_custom_call.1} parent=0
    #allocation2 [shape = 'u8[8192]{0}', space=vmem, size = 0x2000, scoped, tag = 'input window, operand 0, single buffered']
    #allocation3 [shape = 's32[1]{0}', space=sflag, size = 0x4, scoped, tag = 'scoped memory for tpu_custom_call.1']
    #allocation4 [shape = 's32[1]{0}', space=sflag, size = 0x4, scoped, tag = 'scoped memory for tpu_custom_call.1']
    #allocation5 [shape = 'u8[8192]{0}', space=vmem, size = 0x2000, scoped, tag = 'output window, operand 0, single buffered']
    %6 = vsyncpa [#allocation3], 0
    %7 = vsyncpa [#allocation4], 0
    // Predicated region
    $region2: #{tpu_custom_call.1} parent=1 // pred_check
      _
    $region3: #{tpu_custom_call.1} parent=1 // pred_check_branch
      %9 = sbr.rel (0) target = $region5
    $region4: #{tpu_custom_call.1} parent=1 // pred_region
      %s11 = ssub.s32 256, 256
      %12 = vsyncadd [#allocation3], %s11
      %s14 = sshll.u32 [#allocation2], 4
      %s15 = int_to_ptr.vmem [resolvable:$true] %s14
      %17 = dma.hbm_to_vmem [thread:$0]  %s0, 256, %s15, [#allocation3]
    $region5: #{tpu_custom_call.1} parent=1 // pred_fallthru
      _
    // Predicated region
    $region6: #{tpu_custom_call.1} parent=1 // pred_check
      _
    $region7: #{tpu_custom_call.1} parent=1 // pred_check_branch
      %19 = sbr.rel (0) target = $region9
    $region8: #{tpu_custom_call.1} parent=1 // pred_region
      %20 = dma.done [#allocation3], 256
    $region9: #{tpu_custom_call.1} parent=1 // pred_fallthru
      _
    %v21 = vld [vmem:[#allocation2] sm:$0xff]
    %v22 = vld [vmem:[#allocation2 + $0x8] sm:$0xff]
    %23 = vst [vmem:[#allocation5] sm:$0xff] %v21
    %24 = vst [vmem:[#allocation5 + $0x8] sm:$0xff] %v22
    // Predicated region
    $region10: #{tpu_custom_call.1} parent=1 // pred_check
      _
    $region11: #{tpu_custom_call.1} parent=1 // pred_check_branch
      %26 = sbr.rel (0) target = $region13
    $region12: #{tpu_custom_call.1} parent=1 // pred_region
      %s28 = ssub.s32 256, 256
      %29 = vsyncadd [#allocation4], %s28
      %s31 = sshll.u32 [#allocation5], 4
      %s32 = int_to_ptr.vmem [resolvable:$true] %s31
      %34 = dma.vmem_to_hbm [thread:$0]  %s32, 256, %s1, [#allocation4]
    $region13: #{tpu_custom_call.1} parent=1 // pred_fallthru
      _
    // Predicated region
    $region14: #{tpu_custom_call.1} parent=1 // pred_check
      _
    $region15: #{tpu_custom_call.1} parent=1 // pred_check_branch
      %36 = sbr.rel (0) target = $region17
    $region16: #{tpu_custom_call.1} parent=1 // pred_region
      %37 = dma.done [#allocation4], 256
    $region17: #{tpu_custom_call.1} parent=1 // pred_fallthru
      _
    %38 = vsyncpa [#allocation3], 1
    %39 = vsyncpa [#allocation4], 1

</llo_original>
